<compile_context>
chip_gen: v7x
topology: tpu7x:2x2x1
jax: 0.10.0
libtpu: 0.0.40
codegen_flags: <defaults>
</compile_context>

<pallas_src>
import functools

import jax
import jax.numpy as jnp
from jax.experimental import pallas as pl
from jax.experimental.pallas import tpu as pltpu


def _round_up(v, m):
    return ((v + m - 1) // m) * m


# ----------------------------- Pallas kernel -------------------------------
def _patch_embed_kernel(x_ref, w_ref, b_ref, o_ref):
    # x_ref: (tm, K_pad) bf16   w_ref: (K_pad, E_pad) bf16
    # b_ref: (1, E_pad)  f32    o_ref: (tm, E_pad)    f32
    acc = jnp.dot(x_ref[...], w_ref[...], preferred_element_type=jnp.float32)
    o_ref[...] = (acc + b_ref[...]).astype(o_ref.dtype)


def _choose_tm(m_rows, k_pad, e_pad, budget_bytes=20 * 1024 * 1024):
    """Largest 8-aligned row tile (<=1024) whose double-buffered pipeline fits
    a conservative VMEM budget valid on v5e / v6e / v7x."""
    fixed = 2 * k_pad * e_pad * 2 + 2 * e_pad * 4         # weight + bias buffers
    per_row = 2 * (k_pad * 2 + e_pad * 4)                 # 2x (x bf16 + out f32)
    tm = (budget_bytes - fixed) // per_row
    tm = max(8, min(1024, int(tm)))
    tm = (tm // 8) * 8
    m_pad8 = _round_up(m_rows, 8)
    return min(tm, m_pad8)


def _projection(xp, w_pad, b_pad, *, tm):
    M_pad, K_pad = xp.shape
    _, E_pad = w_pad.shape
    grid_m = M_pad // tm

    flops = 2 * M_pad * K_pad * E_pad
    bytes_accessed = (xp.size * xp.dtype.itemsize
                      + w_pad.size * w_pad.dtype.itemsize
                      + b_pad.size * b_pad.dtype.itemsize
                      + M_pad * E_pad * 4)

    # Rough resident-VMEM estimate (double-buffered blocks) -> raise the
    # scoped limit above the 16/32 MiB defaults, but stay under v7x's 64 MiB.
    est = (2 * tm * K_pad * 2 + 2 * tm * E_pad * 4
           + 2 * K_pad * E_pad * 2 + 2 * E_pad * 4)
    vmem_limit = int(min(48 * 1024 * 1024, max(32 * 1024 * 1024, 2 * est)))

    return pl.pallas_call(
        _patch_embed_kernel,
        out_shape=jax.ShapeDtypeStruct((M_pad, E_pad), jnp.float32),
        grid=(grid_m,),
        in_specs=[
            pl.BlockSpec((tm, K_pad), lambda i: (i, 0)),
            pl.BlockSpec((K_pad, E_pad), lambda i: (0, 0)),   # VMEM-resident
            pl.BlockSpec((1, E_pad), lambda i: (0, 0)),       # VMEM-resident
        ],
        out_specs=pl.BlockSpec((tm, E_pad), lambda i: (i, 0)),
        compiler_params=pltpu.CompilerParams(
            dimension_semantics=("parallel",),
            vmem_limit_bytes=vmem_limit,
            # Let XLA fuse the patch-extraction producer of xp into the
            # Mosaic call (avoids materializing the im2col array when legal).
            allow_input_fusion=[True, False, False],
        ),
        cost_estimate=pl.CostEstimate(
            flops=flops, transcendentals=0, bytes_accessed=bytes_accessed),
    )(xp, w_pad, b_pad)


# --------------------------- jitted forward pass ----------------------------
@functools.partial(jax.jit, static_argnums=(3, 4, 5))
def _patch_embed_forward(x, w_pad, b_pad, patch_dhw, embed_dim, flatten_embedding):
    B, D, H, W = x.shape
    pD, pH, pW = patch_dhw
    d, h, w = D // pD, H // pH, W // pW
    N = d * h * w
    M = B * N
    K = pD * pH * pW
    K_pad, E_pad = w_pad.shape
    E = embed_dim

    # Patch extraction (im2col) in bf16: pure layout glue, one fused XLA pass.
    # TODO(synk): a fully BlockSpec-fused extraction needs an in-kernel
    # lane-changing reshape/transpose Mosaic may not lower; mitigated with the
    # bf16 intermediate + allow_input_fusion hint instead.
    xp = x.astype(jnp.bfloat16)
    xp = xp.reshape(B, d, pD, h, pH, w, pW)
    xp = xp.transpose(0, 1, 3, 5, 2, 4, 6).reshape(M, K)   # rows = patches

    tm = _choose_tm(M, K_pad, E_pad)
    M_pad = pl.cdiv(M, tm) * tm
    xp = jnp.pad(xp, ((0, M_pad - M), (0, K_pad - K)))

    out = _projection(xp, w_pad, b_pad, tm=tm)             # (M_pad, E_pad) f32
    out = out[:M, :E].reshape(B, N, E)                     # drop padding
    if not flatten_embedding:
        out = out.reshape(B, d, h, w, E)
    return out


# ------------------------------ Module wrapper ------------------------------
class PatchEmbed3D:
    """JAX/Pallas port of PatchEmbed3D (norm_layer=None -> Identity)."""

    def __init__(self, img_size=16, patch_size=8, in_chans=4, embed_dim=32,
                 img_depth=8, norm_layer=None, flatten_embedding=True, key=None):
        assert norm_layer is None  # TODO(synk): only Identity norm supported
        iH, iW = (img_size, img_size) if isinstance(img_size, int) else img_size
        pH, pW = (patch_size, patch_size) if isinstance(patch_size, int) else patch_size
        assert img_depth % in_chans == 0
        self.img_size = (iH, iW)
        self.patch_size = (in_chans, pH, pW)               # (patch_D, patch_H, patch_W)
        self.patches_resolution = (img_depth // in_chans, iH // pH, iW // pW)
        self.num_patches = (self.patches_resolution[0]
                            * self.patches_resolution[1]
                            * self.patches_resolution[2])
        self.in_chans = in_chans
        self.embed_dim = embed_dim
        self.flatten_embedding = flatten_embedding

        # Conv3d(1, embed_dim, kernel=(in_chans, pH, pW)) params (synthetic init).
        key = jax.random.PRNGKey(0) if key is None else key
        kw, kb = jax.random.split(key)
        fan_in = in_chans * pH * pW
        bound = 1.0 / jnp.sqrt(fan_in)
        self.weight = jax.random.uniform(kw, (embed_dim, 1, in_chans, pH, pW),
                                         jnp.float32, -bound, bound)
        self.bias = jax.random.uniform(kb, (embed_dim,), jnp.float32, -bound, bound)

        # Pre-packed matmul params: (K_pad, E_pad) bf16 weight, f32 bias,
        # zero-padded to lane-dense (multiple-of-128) widths.
        K = fan_in
        K_pad = _round_up(K, 128)
        E_pad = _round_up(embed_dim, 128)
        w_mat = self.weight.reshape(embed_dim, K).T        # (K, E)
        self.w_pad = jnp.zeros((K_pad, E_pad), jnp.bfloat16).at[:K, :embed_dim].set(
            w_mat.astype(jnp.bfloat16))
        self.b_pad = jnp.zeros((1, E_pad), jnp.float32).at[0, :embed_dim].set(self.bias)

    def __call__(self, x):
        # x: (B, D, H, W) -- matches the PyTorch forward's input layout.
        B, D, H, W = x.shape
        pD, pH, pW = self.patch_size
        assert D % pD == 0 and H % pH == 0 and W % pW == 0
        return _patch_embed_forward(x, self.w_pad, self.b_pad,
                                    self.patch_size, self.embed_dim,
                                    self.flatten_embedding)


# ------------------------------- reference ----------------------------------
def _reference(module, x):
    # Same bf16 operand rounding as the kernel; f32 accumulation.
    B, D, H, W = x.shape
    pD, pH, pW = module.patch_size
    d, h, w = D // pD, H // pH, W // pW
    xb = x.astype(jnp.bfloat16).astype(jnp.float32)
    xp = xb.reshape(B, d, pD, h, pH, w, pW).transpose(0, 1, 3, 5, 2, 4, 6)
    xp = xp.reshape(B, d * h * w, pD * pH * pW)
    w_mat = module.weight.reshape(module.embed_dim, -1).T
    w_mat = w_mat.astype(jnp.bfloat16).astype(jnp.float32)
    out = jnp.einsum("bnk,ke->bne", xp, w_mat, precision=jax.lax.Precision.HIGHEST)
    return out + module.bias[None, None, :]


if __name__ == "__main__":
    # Small shapes consistent with the module: B=2, img_depth=8, H=W=16,
    # in_chans (= patch depth) = 4, spatial patch = 8, embed_dim = 32.
    B, img_depth, img_size = 2, 8, 16
    in_chans, patch_size, embed_dim = 4, 8, 32

    key = jax.random.PRNGKey(0)
    kx, kp = jax.random.split(key)
    x = jax.random.normal(kx, (B, img_depth, img_size, img_size), jnp.float32)

    module = PatchEmbed3D(img_size=img_size, patch_size=patch_size,
                          in_chans=in_chans, embed_dim=embed_dim,
                          img_depth=img_depth, key=kp)

    out = jax.block_until_ready(module(x))

    ref = _reference(module, x)
    assert out.shape == (B, module.num_patches, embed_dim), out.shape
    assert jnp.allclose(out, ref, atol=1e-3, rtol=1e-3), \
        float(jnp.max(jnp.abs(out - ref)))

    print("KERNEL_OK")
</pallas_src>

<mosaic_0001>
module attributes {stable_mosaic.version = 11 : i64} {
  func.func @_patch_embed_kernel(%arg0: i32, %arg1: memref<16x256xbf16, #tpu.memory_space<vmem>>, %arg2: memref<256x128xbf16, #tpu.memory_space<vmem>>, %arg3: memref<1x128xf32, #tpu.memory_space<vmem>>, %arg4: memref<16x128xf32, #tpu.memory_space<vmem>>) attributes {dimension_semantics = [#tpu.dimension_semantics<parallel>], iteration_bounds = array<i64: 1>, scalar_prefetch = 0 : i64, scratch_operands = 0 : i64, tpu.core_type = #tpu.core_type<tc>, window_params = [{transform_indices = @transform_0, window_bounds = array<i64: 16, 256>}, {pipeline_mode = #tpu.pipeline_mode<synchronous>, transform_indices = @transform_1, window_bounds = array<i64: 256, 128>}, {pipeline_mode = #tpu.pipeline_mode<synchronous>, transform_indices = @transform_2, window_bounds = array<i64: 1, 128>}, {transform_indices = @transform_3, window_bounds = array<i64: 16, 128>}]} {
    %c0 = arith.constant 0 : index
    %c0_0 = arith.constant 0 : index
    %0 = vector.load %arg1[%c0, %c0_0] : memref<16x256xbf16, #tpu.memory_space<vmem>>, vector<16x256xbf16>
    %c0_1 = arith.constant 0 : index
    %c0_2 = arith.constant 0 : index
    %1 = vector.load %arg2[%c0_1, %c0_2] : memref<256x128xbf16, #tpu.memory_space<vmem>>, vector<256x128xbf16>
    %cst = arith.constant dense<0.000000e+00> : vector<16x128xf32>
    %2 = tpu.matmul %0, %1, %cst {dimension_numbers = #tpu.dot_dimension_numbers<[1], [0], [0], [1], [0, 0, 1, 1], [], []>} : vector<16x256xbf16>, vector<256x128xbf16>, vector<16x128xf32> -> vector<16x128xf32>
    %c0_3 = arith.constant 0 : index
    %c0_4 = arith.constant 0 : index
    %3 = vector.load %arg3[%c0_3, %c0_4] : memref<1x128xf32, #tpu.memory_space<vmem>>, vector<1x128xf32>
    %4 = vector.broadcast %3 : vector<1x128xf32> to vector<16x128xf32>
    %5 = arith.addf %2, %4 : vector<16x128xf32>
    %c0_5 = arith.constant 0 : index
    %c0_6 = arith.constant 0 : index
    %6 = vector.load %arg4[%c0_5, %c0_6] : memref<16x128xf32, #tpu.memory_space<vmem>>, vector<16x128xf32>
    tpu.vector_store %arg4[%c0_5, %c0_6], %5 {strides = array<i32>} : memref<16x128xf32, #tpu.memory_space<vmem>>, vector<16x128xf32>,
    return
  }
  func.func @transform_0(%arg0: i32) -> (i32, i32) {
    %c0_i32 = arith.constant 0 : i32
    %c0_i32_0 = arith.constant 0 : i32
    return %arg0, %c0_i32 : i32, i32
  }
  func.func @transform_1(%arg0: i32) -> (i32, i32) {
    %c0_i32 = arith.constant 0 : i32
    %c0_i32_0 = arith.constant 0 : i32
    %c0_i32_1 = arith.constant 0 : i32
    return %c0_i32, %c0_i32_0 : i32, i32
  }
  func.func @transform_2(%arg0: i32) -> (i32, i32) {
    %c0_i32 = arith.constant 0 : i32
    %c0_i32_0 = arith.constant 0 : i32
    %c0_i32_1 = arith.constant 0 : i32
    return %c0_i32, %c0_i32_0 : i32, i32
  }
  func.func @transform_3(%arg0: i32) -> (i32, i32) {
    %c0_i32 = arith.constant 0 : i32
    %c0_i32_0 = arith.constant 0 : i32
    return %arg0, %c0_i32 : i32, i32
  }
}

</mosaic_0001>

<llo_original>
// kernel: _patch_embed_forward.1
$region0: #{_patch_embed_forward.1}
  #allocation0 [shape = 'u32[]', space=smem, size = 0x4, offset = 0x4, fixed_abs, tag = 'smem constant byte address 0x4 - core index']
  #allocation1 [shape = 'u32[144,128]{1,0:T(1,128)}', space=vmem, size = 0x12000, scoped, tag = 'internal scratch']
  %s0 = inlined_call_operand.vmem [shape: bf16[16,256], index: 0, kind: input, shape index: {}]
  %s1 = inlined_call_operand.vmem [shape: bf16[256,128], index: 1, kind: input, shape index: {}]
  %s2 = inlined_call_operand.vmem [shape: f32[1,128], index: 2, kind: input, shape index: {}]
  %s3 = inlined_call_operand.vmem [shape: f32[16,128], index: 3, kind: output, shape index: {}]
  %s4 = sld [smem:[#allocation0]]
  $region22: #{_patch_embed_forward.1} parent=0
    _
  %s6 = ssub.s32 1, %s4
  %s7 = scalar_select 0, %s6, %s4
  // Predicated region
  $region2: #{_patch_embed_forward.1} parent=0 // pred_check
    _
  $region3: #{_patch_embed_forward.1} parent=0 // pred_check_branch
    %9 = sbr.rel (0) target = $region5
  $region4: #{_patch_embed_forward.1} parent=0 // pred_region
    _
  $region5: #{_patch_embed_forward.1} parent=0 // pred_fallthru
    _
  // Predicated region
  $region6: #{_patch_embed_forward.1} parent=0 // pred_check
    _
  $region7: #{_patch_embed_forward.1} parent=0 // pred_check_branch
    %11 = sbr.rel (0) target = $region9
  $region8: #{_patch_embed_forward.1} parent=0 // pred_region
    _
  $region9: #{_patch_embed_forward.1} parent=0 // pred_fallthru
    _
  // Predicated region
  $region10: #{_patch_embed_forward.1} parent=0 // pred_check
    _
  $region11: #{_patch_embed_forward.1} parent=0 // pred_check_branch
    %13 = sbr.rel (0) target = $region13
  $region12: #{_patch_embed_forward.1} parent=0 // pred_region
    _
  $region13: #{_patch_embed_forward.1} parent=0 // pred_fallthru
    _
  %v15 = vld [vmem:[%s0] sm:$0xff]
  %v16 = vld [vmem:[%s0 + $0x8] sm:$0xff]
  %v17 = vld [vmem:[%s1] sm:$0xf]
  %v18 = vld [vmem:[%s1 + $0x4] sm:$0xf]
  %v19 = vld [vmem:[%s1 + $0x8] sm:$0xf]
  %v20 = vld [vmem:[%s1 + $0xc] sm:$0xf]
  %v21 = vld [vmem:[%s1 + $0x10] sm:$0xf]
  %v22 = vld [vmem:[%s1 + $0x14] sm:$0xf]
  %v23 = vld [vmem:[%s1 + $0x18] sm:$0xf]
  %v24 = vld [vmem:[%s1 + $0x1c] sm:$0xf]
  %v25 = vld [vmem:[%s1 + $0x20] sm:$0xf]
  %v26 = vld [vmem:[%s1 + $0x24] sm:$0xf]
  %v27 = vld [vmem:[%s1 + $0x28] sm:$0xf]
  %v28 = vld [vmem:[%s1 + $0x2c] sm:$0xf]
  %v29 = vld [vmem:[%s1 + $0x30] sm:$0xf]
  %v30 = vld [vmem:[%s1 + $0x34] sm:$0xf]
  %v31 = vld [vmem:[%s1 + $0x38] sm:$0xf]
  %v32 = vld [vmem:[%s1 + $0x3c] sm:$0xf]
  %v33 = vld [vmem:[%s1 + $0x40] sm:$0xf]
  %v34 = vld [vmem:[%s1 + $0x44] sm:$0xf]
  %v35 = vld [vmem:[%s1 + $0x48] sm:$0xf]
  %v36 = vld [vmem:[%s1 + $0x4c] sm:$0xf]
  %v37 = vld [vmem:[%s1 + $0x50] sm:$0xf]
  %v38 = vld [vmem:[%s1 + $0x54] sm:$0xf]
  %v39 = vld [vmem:[%s1 + $0x58] sm:$0xf]
  %v40 = vld [vmem:[%s1 + $0x5c] sm:$0xf]
  %v41 = vld [vmem:[%s1 + $0x60] sm:$0xf]
  %v42 = vld [vmem:[%s1 + $0x64] sm:$0xf]
  %v43 = vld [vmem:[%s1 + $0x68] sm:$0xf]
  %v44 = vld [vmem:[%s1 + $0x6c] sm:$0xf]
  %v45 = vld [vmem:[%s1 + $0x70] sm:$0xf]
  %v46 = vld [vmem:[%s1 + $0x74] sm:$0xf]
  %v47 = vld [vmem:[%s1 + $0x78] sm:$0xf]
  %v48 = vld [vmem:[%s1 + $0x7c] sm:$0xf]
  %v49 = vld [vmem:[%s2] sm:$0x1]
  %v51 = vlaneseq
  %v52 = vshrl.u32 %v51, 7
  %v53 = vsub.s32 0, %v52
  %v54 = vrot.slane %v49, %v53
  %v58 = vunpack.c.l.b16 %v15
  %v59 = vunpack.c.h.b16 %v15
  %v60 = vunpack.c.l.b16 %v16
  %v61 = vunpack.c.h.b16 %v16
  %v62 = vpack.c.b16 %v60, %v58
  %v63 = vpack.c.b16 %v61, %v59
  %v98 = vunpack.c.l.b16 %v17
  %v99 = vunpack.c.l.b16 %v18
  %v100 = vunpack.c.l.b16 %v19
  %v101 = vunpack.c.l.b16 %v20
  %v102 = vunpack.c.l.b16 %v21
  %v103 = vunpack.c.l.b16 %v22
  %v104 = vunpack.c.l.b16 %v23
  %v105 = vunpack.c.l.b16 %v24
  %v106 = vunpack.c.l.b16 %v25
  %v107 = vunpack.c.l.b16 %v26
  %v108 = vunpack.c.l.b16 %v27
  %v109 = vunpack.c.l.b16 %v28
  %v110 = vunpack.c.l.b16 %v29
  %v111 = vunpack.c.l.b16 %v30
  %v112 = vunpack.c.l.b16 %v31
  %v113 = vunpack.c.l.b16 %v32
  %v114 = vunpack.c.l.b16 %v33
  %v115 = vunpack.c.l.b16 %v34
  %v116 = vunpack.c.l.b16 %v35
  %v117 = vunpack.c.l.b16 %v36
  %v118 = vunpack.c.l.b16 %v37
  %v119 = vunpack.c.l.b16 %v38
  %v120 = vunpack.c.l.b16 %v39
  %v121 = vunpack.c.l.b16 %v40
  %v122 = vunpack.c.l.b16 %v41
  %v123 = vunpack.c.l.b16 %v42
  %v124 = vunpack.c.l.b16 %v43
  %v125 = vunpack.c.l.b16 %v44
  %v126 = vunpack.c.l.b16 %v45
  %v127 = vunpack.c.l.b16 %v46
  %v128 = vunpack.c.l.b16 %v47
  %v129 = vunpack.c.l.b16 %v48
  %v130 = vpack.c.b16 %v99, %v98
  %v131 = vpack.c.b16 %v101, %v100
  %v132 = vpack.c.b16 %v103, %v102
  %v133 = vpack.c.b16 %v105, %v104
  %v134 = vpack.c.b16 %v107, %v106
  %v135 = vpack.c.b16 %v109, %v108
  %v136 = vpack.c.b16 %v111, %v110
  %v137 = vpack.c.b16 %v113, %v112
  %v138 = vpack.c.b16 %v115, %v114
  %v139 = vpack.c.b16 %v117, %v116
  %v140 = vpack.c.b16 %v119, %v118
  %v141 = vpack.c.b16 %v121, %v120
  %v142 = vpack.c.b16 %v123, %v122
  %v143 = vpack.c.b16 %v125, %v124
  %v144 = vpack.c.b16 %v127, %v126
  %v145 = vpack.c.b16 %v129, %v128
  %162 = vmatprep.subr.bf16.mxu0 0
  %163 = vmatpush1.bf16.msra.mxu0 %v130
  %164 = vmatprep.subr.bf16.mxu0 0
  %165 = vmatpush1.bf16.msra.mxu0 %v131
  %166 = vmatprep.subr.bf16.mxu0 0
  %167 = vmatpush1.bf16.msra.mxu0 %v132
  %168 = vmatprep.subr.bf16.mxu0 0
  %169 = vmatpush1.bf16.msra.mxu0 %v133
  %170 = vmatprep.subr.bf16.mxu0 0
  %171 = vmatpush1.bf16.msra.mxu0 %v134
  %172 = vmatprep.subr.bf16.mxu0 0
  %173 = vmatpush1.bf16.msra.mxu0 %v135
  %174 = vmatprep.subr.bf16.mxu0 0
  %175 = vmatpush1.bf16.msra.mxu0 %v136
  %176 = vmatprep.subr.bf16.mxu0 0
  %177 = vmatpush1.bf16.msra.mxu0 %v137
  %178 = vmatprep.subr.bf16.mxu0 0
  %179 = vmatpush1.bf16.msra.mxu0 %v138
  %180 = vmatprep.subr.bf16.mxu0 0
  %181 = vmatpush1.bf16.msra.mxu0 %v139
  %182 = vmatprep.subr.bf16.mxu0 0
  %183 = vmatpush1.bf16.msra.mxu0 %v140
  %184 = vmatprep.subr.bf16.mxu0 0
  %185 = vmatpush1.bf16.msra.mxu0 %v141
  %186 = vmatprep.subr.bf16.mxu0 0
  %187 = vmatpush1.bf16.msra.mxu0 %v142
  %188 = vmatprep.subr.bf16.mxu0 0
  %189 = vmatpush1.bf16.msra.mxu0 %v143
  %190 = vmatprep.subr.bf16.mxu0 0
  %191 = vmatpush1.bf16.msra.mxu0 %v144
  %192 = vmatprep.subr.bf16.mxu0 0
  %193 = vmatpush1.bf16.msra.mxu0 %v145
  %194 = vmatprep.mubr.bf16.mxu0 %v63
  %195 = vmatmul.mubr.bf16.gmra.mrb[0].mxu0 %v62
  %v196 = vpop.f32.mrb[0].mxu0
  %v197 = vadd.f32 %v54, %v196
  %v198 = vpop.f32.mrb[0].mxu0
  %v199 = vpop.f32.mrb[0].mxu0
  %v200 = vadd.f32 %v54, %v199
  %v201 = vpop.f32.mrb[0].mxu0
  %202 = vdwg.mxu0
  %203 = vst [vmem:[%s3] sm:$0xff] %v197
  %204 = vst [vmem:[%s3 + $0x8] sm:$0xff] %v200
  // Predicated region
  $region14: #{_patch_embed_forward.1} parent=0 // pred_check
    _
  $region15: #{_patch_embed_forward.1} parent=0 // pred_check_branch
    %206 = sbr.rel (0) target = $region17
  $region16: #{_patch_embed_forward.1} parent=0 // pred_region
    _
  $region17: #{_patch_embed_forward.1} parent=0 // pred_fallthru
    _
  // Predicated region
  $region18: #{_patch_embed_forward.1} parent=0 // pred_check
    _
  $region19: #{_patch_embed_forward.1} parent=0 // pred_check_branch
    %208 = sbr.rel (0) target = $region21
  $region20: #{_patch_embed_forward.1} parent=0 // pred_region
    _
  $region21: #{_patch_embed_forward.1} parent=0 // pred_fallthru
    _

</llo_original>
